<compile_context>
chip_gen: v5e
topology: v5e:2x2
jax: 0.10.0
libtpu: 0.0.40
codegen_flags: <defaults>
</compile_context>

<pallas_src>
import jax
import jax.numpy as jnp
from jax.experimental import pallas as pl
from jax.experimental.pallas import tpu as pltpu


# ---------------------------------------------------------------------------
# helpers
# ---------------------------------------------------------------------------
def _round_up(v, m):
    return ((v + m - 1) // m) * m


def _num_tensorcores():
    """Best-effort TensorCores-per-chip (v7x: 2, v5e/v6e: 1).  Falls back to 1."""
    try:
        info = pltpu.get_tpu_info()
        for name in ("num_cores", "core_count", "num_tensorcores",
                     "tensorcore_count", "cores_per_chip", "num_cores_per_chip"):
            v = getattr(info, name, None)
            if isinstance(v, int) and v > 0:
                return v
    except Exception:
        pass
    return 1


def _pick_lane_tile(HW, N, num_tc, tn_max):
    """Pick (tn, n_steps): lane (pixel) tile width (multiple of 128) and the
    number of lane tiles per image, with n_steps * tn >= HW."""
    LANE = 128
    tn_max = max(LANE, (tn_max // LANE) * LANE)
    if HW > tn_max:
        n_steps = pl.cdiv(HW, tn_max)
        # v7x: keep the total "parallel" step count a multiple of the core
        # count while it is small, so neither TensorCore idles.
        if num_tc > 1 and (N * n_steps) < 8 * num_tc and (N * n_steps) % num_tc:
            n_steps += 1
        tn = _round_up(pl.cdiv(HW, n_steps), LANE)     # trim last-step padding
        return tn, n_steps
    # The whole image fits in one lane tile.
    if num_tc <= 1 or N >= 2 * num_tc:
        # v5e/v6e (single TensorCore) or enough batch-level grid steps already:
        # don't split -- it would only add ~0.35us/step of grid overhead.
        return _round_up(HW, LANE), 1
    # v7x with a tiny batch: split the image so every core gets >= 2 steps.
    steps = max(1, min(pl.cdiv(2 * num_tc, N), pl.cdiv(HW, LANE)))
    tn = _round_up(pl.cdiv(HW, steps), LANE)
    return tn, pl.cdiv(HW, tn)


def _pack_weights(params):
    """Pack every layer's [W | b] into ONE resident bf16 buffer.

    Layer blocks are stacked along rows (offsets rounded to 16 so in-kernel
    static slices stay sublane-aligned for packed bf16) and zero-padded along
    columns to a common width.  Returns (pack_bf16, per-layer row offsets)."""
    blocks = [
        (params["we1"], params["be1"]),
        (params["we2"], params["be2"]),
        (params["we3"], params["be3"]),
        (params["wg1"], params["bg1"]),
        (params["wg2"], params["bg2"]),
        (params["wg3"], params["bg3"]),
    ]
    n_cols = max(w.shape[1] + 1 for w, _ in blocks)
    offs, off = [], 0
    for w, _ in blocks:
        offs.append(off)
        off = _round_up(off + w.shape[0], 16)
    pack = jnp.zeros((off, n_cols), jnp.float32)
    for (w, b), r in zip(blocks, offs):
        wb = jnp.concatenate([w, b.reshape(-1, 1)], axis=1)
        pack = pack.at[r:r + w.shape[0], : wb.shape[1]].set(wb)
    return pack.astype(jnp.bfloat16), tuple(offs)


# ---------------------------------------------------------------------------
# kernel
# ---------------------------------------------------------------------------
def _make_kernel(Cx, Cg, nf_e0, nf_e1, nf0, nf1, c_out, row_off):
    r_e1, r_e2, r_e3, r_g1, r_g2, r_g3 = row_off

    def kernel(x_ref, g_ref, w_ref, o_ref):
        # Pixels on the lane (fast) axis, channels on sublanes.
        x16 = x_ref[...].astype(jnp.bfloat16)            # (Cx, tn)
        g16 = g_ref[...].astype(jnp.bfloat16)            # (Cg, tn)

        def dot_w(row, out_ch, col, in_ch, a16):
            # bf16 weights x bf16 activations -> f32 accumulation on the MXU.
            w = w_ref[pl.ds(row, out_ch), pl.ds(col, in_ch)]
            return jnp.dot(w, a16, preferred_element_type=jnp.float32)

        def bias(row, out_ch, col):                      # (out_ch, 1), f32
            return w_ref[pl.ds(row, out_ch), pl.ds(col, 1)].astype(jnp.float32)

        relu = lambda v: jnp.maximum(v, 0.0)
        bf16 = lambda v: v.astype(jnp.bfloat16)

        # ---- encoder: netG_mlp_v1 on g, end activation ReLU ----
        h = relu(dot_w(r_e1, nf_e0, 0, Cg, g16) + bias(r_e1, nf_e0, Cg))
        h = relu(dot_w(r_e2, nf_e1, 0, nf_e0, bf16(h)) + bias(r_e2, nf_e1, nf_e0))
        g_feat = relu(dot_w(r_e3, nf0, 0, nf_e1, bf16(h)) + bias(r_e3, nf0, nf_e1))

        # ---- torch.cat([x, g_feat, g], dim=1) folded into the first generator
        #      conv as a split-weight accumulate (no cross-lane concat) ----
        h = relu(dot_w(r_g1, nf0, 0, Cx, x16)
                 + dot_w(r_g1, nf0, Cx, nf0, bf16(g_feat))
                 + dot_w(r_g1, nf0, Cx + nf0, Cg, g16)
                 + bias(r_g1, nf0, Cx + nf0 + Cg))

        # ---- rest of the generator, end activation Tanh ----
        h = relu(dot_w(r_g2, nf1, 0, nf0, bf16(h)) + bias(r_g2, nf1, nf0))
        out = dot_w(r_g3, c_out, 0, nf1, bf16(h)) + bias(r_g3, c_out, nf1)
        o_ref[...] = jnp.tanh(out)

    return kernel


# ---------------------------------------------------------------------------
# wrapper
# ---------------------------------------------------------------------------
def netg_mlp_ns_forward(x_nchw, g_nchw, params, *, tn_max=4096):
    """x, g: NCHW float32.  tn_max: maximum lane (pixel) tile width."""
    N, Cx, H, W = x_nchw.shape
    Ng, Cg, Hg, Wg = g_nchw.shape
    assert (N, H, W) == (Ng, Hg, Wg)
    HW = H * W

    nf_e0 = params["we1"].shape[0]
    nf_e1 = params["we2"].shape[0]
    nf0 = params["we3"].shape[0]
    nf1 = params["wg2"].shape[0]
    c_out = params["wg3"].shape[0]
    assert params["wg1"].shape == (nf0, Cx + nf0 + Cg)

    num_tc = _num_tensorcores()
    tn, n_steps = _pick_lane_tile(HW, N, num_tc, tn_max)
    HW_pad = tn * n_steps

    # NCHW -> (N, C, H*W): free contiguous reshape, no HBM transpose pass.
    x3 = x_nchw.reshape(N, Cx, HW)
    g3 = g_nchw.reshape(N, Cg, HW)
    if HW_pad != HW:
        pad = ((0, 0), (0, 0), (0, HW_pad - HW))
        x3 = jnp.pad(x3, pad)
        g3 = jnp.pad(g3, pad)

    w_pack, row_off = _pack_weights(params)
    kernel = _make_kernel(Cx, Cg, nf_e0, nf_e1, nf0, nf1, c_out, row_off)

    out = pl.pallas_call(
        kernel,
        out_shape=jax.ShapeDtypeStruct((N, c_out, HW_pad), jnp.float32),
        grid_spec=pltpu.PrefetchScalarGridSpec(
            num_scalar_prefetch=0,
            grid=(N, n_steps),
            in_specs=[
                pl.BlockSpec((None, Cx, tn), lambda n, i: (n, 0, i)),
                pl.BlockSpec((None, Cg, tn), lambda n, i: (n, 0, i)),
                # single packed weight buffer, resident across all grid steps
                pl.BlockSpec(w_pack.shape, lambda n, i: (0, 0)),
            ],
            out_specs=pl.BlockSpec((None, c_out, tn), lambda n, i: (n, 0, i)),
        ),
        compiler_params=pltpu.CompilerParams(
            dimension_semantics=("parallel", "parallel"),
            vmem_limit_bytes=32 * 1024 * 1024),
    )(x3, g3, w_pack)

    if HW_pad != HW:
        out = out[:, :, :HW]
    return out.reshape(N, c_out, H, W)


# ---------------------------------------------------------------------------
# synthetic params + pure-JAX reference (for verification)
# ---------------------------------------------------------------------------
def init_params(key, c_in, g_in, n_feat_enc, n_feat, c_out):
    """Deterministic synthetic weights, PyTorch Conv2d layout:
    weight (out_ch, in_ch) [1x1 kernel squeezed], bias (out_ch,)."""
    ks = jax.random.split(key, 12)
    p = {}

    def lin(kw, kb, fan_in, fan_out):
        scale = 1.0 / jnp.sqrt(jnp.float32(fan_in))
        w = jax.random.uniform(kw, (fan_out, fan_in), jnp.float32, -scale, scale)
        b = jax.random.uniform(kb, (fan_out,), jnp.float32, -scale, scale)
        return w, b

    # encoder: g_in -> n_feat_enc[0] -> n_feat_enc[1] -> n_feat[0]
    p["we1"], p["be1"] = lin(ks[0], ks[1], g_in, n_feat_enc[0])
    p["we2"], p["be2"] = lin(ks[2], ks[3], n_feat_enc[0], n_feat_enc[1])
    p["we3"], p["be3"] = lin(ks[4], ks[5], n_feat_enc[1], n_feat[0])
    # generator: (c_in + n_feat[0] + g_in) -> n_feat[0] -> n_feat[1] -> c_out
    gen_in = c_in + n_feat[0] + g_in
    p["wg1"], p["bg1"] = lin(ks[6], ks[7], gen_in, n_feat[0])
    p["wg2"], p["bg2"] = lin(ks[8], ks[9], n_feat[0], n_feat[1])
    p["wg3"], p["bg3"] = lin(ks[10], ks[11], n_feat[1], c_out)
    return p


def reference_forward(x_nchw, g_nchw, p):
    """Pure-JAX f32 reference mirroring the PyTorch forward."""
    N, Cx, H, W = x_nchw.shape
    Cg = g_nchw.shape[1]
    R = N * H * W
    x = jnp.transpose(x_nchw, (0, 2, 3, 1)).reshape(R, Cx)
    g = jnp.transpose(g_nchw, (0, 2, 3, 1)).reshape(R, Cg)
    relu = lambda a: jnp.maximum(a, 0.0)
    h = relu(g @ p["we1"].T + p["be1"])
    h = relu(h @ p["we2"].T + p["be2"])
    g_feat = relu(h @ p["we3"].T + p["be3"])
    z = jnp.concatenate([x, g_feat, g], axis=-1)
    h = relu(z @ p["wg1"].T + p["bg1"])
    h = relu(h @ p["wg2"].T + p["bg2"])
    out = jnp.tanh(h @ p["wg3"].T + p["bg3"])
    c_out = out.shape[-1]
    return jnp.transpose(out.reshape(N, H, W, c_out), (0, 3, 1, 2))


if __name__ == "__main__":
    # Config consistent with the module:
    #   param = {'g_in': 4, 'c_in': 4, 'c_out': 3,
    #            'n_features_encoder': [32, 32], 'n_features': [32, 32],
    #            'non_linearity': 'relu', 'bn': None}
    N, H, W = 2, 16, 16
    c_in, g_in, c_out = 4, 4, 3
    n_feat_enc = [32, 32]
    n_feat = [32, 32]

    key = jax.random.PRNGKey(0)
    kx, kg, kp = jax.random.split(key, 3)
    x = jax.random.normal(kx, (N, c_in, H, W), jnp.float32)
    g = jax.random.normal(kg, (N, g_in, H, W), jnp.float32)
    params = init_params(kp, c_in, g_in, n_feat_enc, n_feat, c_out)

    forward = jax.jit(netg_mlp_ns_forward)
    out = jax.block_until_ready(forward(x, g, params))
    ref = jax.block_until_ready(reference_forward(x, g, params))

    assert out.shape == (N, c_out, H, W)
    # bf16 MXU operands with f32 accumulation: compare against the f32
    # reference at a bf16-appropriate tolerance (outputs are tanh-bounded).
    assert jnp.allclose(out, ref, atol=3e-2, rtol=3e-2), "mismatch vs reference"
    print("KERNEL_OK")
</pallas_src>

<mosaic_0001>
module attributes {stable_mosaic.version = 11 : i64} {
  func.func @kernel(%arg0: i32, %arg1: i32, %arg2: memref<1x4x256xf32, #tpu.memory_space<vmem>>, %arg3: memref<1x4x256xf32, #tpu.memory_space<vmem>>, %arg4: memref<176x41xbf16, #tpu.memory_space<vmem>>, %arg5: memref<1x3x256xf32, #tpu.memory_space<vmem>>) attributes {dimension_semantics = [#tpu.dimension_semantics<parallel>, #tpu.dimension_semantics<parallel>], iteration_bounds = array<i64: 2, 1>, scalar_prefetch = 0 : i64, scratch_operands = 0 : i64, tpu.core_type = #tpu.core_type<tc>, window_params = [{transform_indices = @transform_0, window_bounds = array<i64: 1, 4, 256>}, {transform_indices = @transform_1, window_bounds = array<i64: 1, 4, 256>}, {pipeline_mode = #tpu.pipeline_mode<synchronous>, transform_indices = @transform_2, window_bounds = array<i64: 176, 41>}, {transform_indices = @transform_3, window_bounds = array<i64: 1, 3, 256>}]} {
    %c0 = arith.constant 0 : index
    %c0_0 = arith.constant 0 : index
    %c0_1 = arith.constant 0 : index
    %0 = vector.load %arg2[%c0, %c0_0, %c0_1] : memref<1x4x256xf32, #tpu.memory_space<vmem>>, vector<1x4x256xf32>
    %1 = vector.shape_cast %0 : vector<1x4x256xf32> to vector<4x256xf32>
    %2 = arith.truncf %1 : vector<4x256xf32> to vector<4x256xbf16>
    %c0_2 = arith.constant 0 : index
    %c0_3 = arith.constant 0 : index
    %c0_4 = arith.constant 0 : index
    %3 = vector.load %arg3[%c0_2, %c0_3, %c0_4] : memref<1x4x256xf32, #tpu.memory_space<vmem>>, vector<1x4x256xf32>
    %4 = vector.shape_cast %3 : vector<1x4x256xf32> to vector<4x256xf32>
    %5 = arith.truncf %4 : vector<4x256xf32> to vector<4x256xbf16>
    %c0_5 = arith.constant 0 : index
    %c0_6 = arith.constant 0 : index
    %6 = vector.load %arg4[%c0_5, %c0_6] : memref<176x41xbf16, #tpu.memory_space<vmem>>, vector<32x4xbf16>
    %cst = arith.constant dense<0.000000e+00> : vector<32x256xf32>
    %7 = tpu.matmul %6, %5, %cst {dimension_numbers = #tpu.dot_dimension_numbers<[1], [0], [0], [1], [0, 0, 1, 1], [], []>} : vector<32x4xbf16>, vector<4x256xbf16>, vector<32x256xf32> -> vector<32x256xf32>
    %c0_7 = arith.constant 0 : index
    %c4 = arith.constant 4 : index
    %8 = vector.load %arg4[%c0_7, %c4] : memref<176x41xbf16, #tpu.memory_space<vmem>>, vector<32x1xbf16>
    %9 = arith.extf %8 : vector<32x1xbf16> to vector<32x1xf32>
    %10 = vector.broadcast %9 : vector<32x1xf32> to vector<32x256xf32>
    %11 = arith.addf %7, %10 : vector<32x256xf32>
    %cst_8 = arith.constant 0.000000e+00 : f32
    %12 = vector.broadcast %cst_8 : f32 to vector<32x256xf32>
    %13 = arith.maximumf %11, %12 : vector<32x256xf32>
    %14 = arith.truncf %13 : vector<32x256xf32> to vector<32x256xbf16>
    %c32 = arith.constant 32 : index
    %c0_9 = arith.constant 0 : index
    %15 = vector.load %arg4[%c32, %c0_9] : memref<176x41xbf16, #tpu.memory_space<vmem>>, vector<32x32xbf16>
    %cst_10 = arith.constant dense<0.000000e+00> : vector<32x256xf32>
    %16 = tpu.matmul %15, %14, %cst_10 {dimension_numbers = #tpu.dot_dimension_numbers<[1], [0], [0], [1], [0, 0, 1, 1], [], []>} : vector<32x32xbf16>, vector<32x256xbf16>, vector<32x256xf32> -> vector<32x256xf32>
    %c32_11 = arith.constant 32 : index
    %c32_12 = arith.constant 32 : index
    %17 = vector.load %arg4[%c32_11, %c32_12] : memref<176x41xbf16, #tpu.memory_space<vmem>>, vector<32x1xbf16>
    %18 = arith.extf %17 : vector<32x1xbf16> to vector<32x1xf32>
    %19 = vector.broadcast %18 : vector<32x1xf32> to vector<32x256xf32>
    %20 = arith.addf %16, %19 : vector<32x256xf32>
    %cst_13 = arith.constant 0.000000e+00 : f32
    %21 = vector.broadcast %cst_13 : f32 to vector<32x256xf32>
    %22 = arith.maximumf %20, %21 : vector<32x256xf32>
    %23 = arith.truncf %22 : vector<32x256xf32> to vector<32x256xbf16>
    %c64 = arith.constant 64 : index
    %c0_14 = arith.constant 0 : index
    %24 = vector.load %arg4[%c64, %c0_14] : memref<176x41xbf16, #tpu.memory_space<vmem>>, vector<32x32xbf16>
    %cst_15 = arith.constant dense<0.000000e+00> : vector<32x256xf32>
    %25 = tpu.matmul %24, %23, %cst_15 {dimension_numbers = #tpu.dot_dimension_numbers<[1], [0], [0], [1], [0, 0, 1, 1], [], []>} : vector<32x32xbf16>, vector<32x256xbf16>, vector<32x256xf32> -> vector<32x256xf32>
    %c64_16 = arith.constant 64 : index
    %c32_17 = arith.constant 32 : index
    %26 = vector.load %arg4[%c64_16, %c32_17] : memref<176x41xbf16, #tpu.memory_space<vmem>>, vector<32x1xbf16>
    %27 = arith.extf %26 : vector<32x1xbf16> to vector<32x1xf32>
    %28 = vector.broadcast %27 : vector<32x1xf32> to vector<32x256xf32>
    %29 = arith.addf %25, %28 : vector<32x256xf32>
    %cst_18 = arith.constant 0.000000e+00 : f32
    %30 = vector.broadcast %cst_18 : f32 to vector<32x256xf32>
    %31 = arith.maximumf %29, %30 : vector<32x256xf32>
    %c96 = arith.constant 96 : index
    %c0_19 = arith.constant 0 : index
    %32 = vector.load %arg4[%c96, %c0_19] : memref<176x41xbf16, #tpu.memory_space<vmem>>, vector<32x4xbf16>
    %cst_20 = arith.constant dense<0.000000e+00> : vector<32x256xf32>
    %33 = tpu.matmul %32, %2, %cst_20 {dimension_numbers = #tpu.dot_dimension_numbers<[1], [0], [0], [1], [0, 0, 1, 1], [], []>} : vector<32x4xbf16>, vector<4x256xbf16>, vector<32x256xf32> -> vector<32x256xf32>
    %34 = arith.truncf %31 : vector<32x256xf32> to vector<32x256xbf16>
    %c96_21 = arith.constant 96 : index
    %c4_22 = arith.constant 4 : index
    %35 = vector.load %arg4[%c96_21, %c4_22] : memref<176x41xbf16, #tpu.memory_space<vmem>>, vector<32x32xbf16>
    %cst_23 = arith.constant dense<0.000000e+00> : vector<32x256xf32>
    %36 = tpu.matmul %35, %34, %cst_23 {dimension_numbers = #tpu.dot_dimension_numbers<[1], [0], [0], [1], [0, 0, 1, 1], [], []>} : vector<32x32xbf16>, vector<32x256xbf16>, vector<32x256xf32> -> vector<32x256xf32>
    %37 = arith.addf %33, %36 : vector<32x256xf32>
    %c96_24 = arith.constant 96 : index
    %c36 = arith.constant 36 : index
    %38 = vector.load %arg4[%c96_24, %c36] : memref<176x41xbf16, #tpu.memory_space<vmem>>, vector<32x4xbf16>
    %cst_25 = arith.constant dense<0.000000e+00> : vector<32x256xf32>
    %39 = tpu.matmul %38, %5, %cst_25 {dimension_numbers = #tpu.dot_dimension_numbers<[1], [0], [0], [1], [0, 0, 1, 1], [], []>} : vector<32x4xbf16>, vector<4x256xbf16>, vector<32x256xf32> -> vector<32x256xf32>
    %40 = arith.addf %37, %39 : vector<32x256xf32>
    %c96_26 = arith.constant 96 : index
    %c40 = arith.constant 40 : index
    %41 = vector.load %arg4[%c96_26, %c40] : memref<176x41xbf16, #tpu.memory_space<vmem>>, vector<32x1xbf16>
    %42 = arith.extf %41 : vector<32x1xbf16> to vector<32x1xf32>
    %43 = vector.broadcast %42 : vector<32x1xf32> to vector<32x256xf32>
    %44 = arith.addf %40, %43 : vector<32x256xf32>
    %cst_27 = arith.constant 0.000000e+00 : f32
    %45 = vector.broadcast %cst_27 : f32 to vector<32x256xf32>
    %46 = arith.maximumf %44, %45 : vector<32x256xf32>
    %47 = arith.truncf %46 : vector<32x256xf32> to vector<32x256xbf16>
    %c128 = arith.constant 128 : index
    %c0_28 = arith.constant 0 : index
    %48 = vector.load %arg4[%c128, %c0_28] : memref<176x41xbf16, #tpu.memory_space<vmem>>, vector<32x32xbf16>
    %cst_29 = arith.constant dense<0.000000e+00> : vector<32x256xf32>
    %49 = tpu.matmul %48, %47, %cst_29 {dimension_numbers = #tpu.dot_dimension_numbers<[1], [0], [0], [1], [0, 0, 1, 1], [], []>} : vector<32x32xbf16>, vector<32x256xbf16>, vector<32x256xf32> -> vector<32x256xf32>
    %c128_30 = arith.constant 128 : index
    %c32_31 = arith.constant 32 : index
    %50 = vector.load %arg4[%c128_30, %c32_31] : memref<176x41xbf16, #tpu.memory_space<vmem>>, vector<32x1xbf16>
    %51 = arith.extf %50 : vector<32x1xbf16> to vector<32x1xf32>
    %52 = vector.broadcast %51 : vector<32x1xf32> to vector<32x256xf32>
    %53 = arith.addf %49, %52 : vector<32x256xf32>
    %cst_32 = arith.constant 0.000000e+00 : f32
    %54 = vector.broadcast %cst_32 : f32 to vector<32x256xf32>
    %55 = arith.maximumf %53, %54 : vector<32x256xf32>
    %56 = arith.truncf %55 : vector<32x256xf32> to vector<32x256xbf16>
    %c160 = arith.constant 160 : index
    %c0_33 = arith.constant 0 : index
    %57 = vector.load %arg4[%c160, %c0_33] : memref<176x41xbf16, #tpu.memory_space<vmem>>, vector<3x32xbf16>
    %cst_34 = arith.constant dense<0.000000e+00> : vector<3x256xf32>
    %58 = tpu.matmul %57, %56, %cst_34 {dimension_numbers = #tpu.dot_dimension_numbers<[1], [0], [0], [1], [0, 0, 1, 1], [], []>} : vector<3x32xbf16>, vector<32x256xbf16>, vector<3x256xf32> -> vector<3x256xf32>
    %c160_35 = arith.constant 160 : index
    %c32_36 = arith.constant 32 : index
    %59 = vector.load %arg4[%c160_35, %c32_36] : memref<176x41xbf16, #tpu.memory_space<vmem>>, vector<3x1xbf16>
    %60 = arith.extf %59 : vector<3x1xbf16> to vector<3x1xf32>
    %61 = vector.broadcast %60 : vector<3x1xf32> to vector<3x256xf32>
    %62 = arith.addf %58, %61 : vector<3x256xf32>
    %63 = math.tanh %62 : vector<3x256xf32>
    %c0_37 = arith.constant 0 : index
    %c0_38 = arith.constant 0 : index
    %c0_39 = arith.constant 0 : index
    %64 = vector.load %arg5[%c0_37, %c0_38, %c0_39] : memref<1x3x256xf32, #tpu.memory_space<vmem>>, vector<1x3x256xf32>
    %65 = vector.shape_cast %64 : vector<1x3x256xf32> to vector<3x256xf32>
    %66 = vector.shape_cast %63 : vector<3x256xf32> to vector<1x3x256xf32>
    tpu.vector_store %arg5[%c0_37, %c0_38, %c0_39], %66 {strides = array<i32>} : memref<1x3x256xf32, #tpu.memory_space<vmem>>, vector<1x3x256xf32>,
    return
  }
  func.func @transform_0(%arg0: i32, %arg1: i32) -> (i32, i32, i32) {
    %c0_i32 = arith.constant 0 : i32
    %c0_i32_0 = arith.constant 0 : i32
    return %arg0, %c0_i32, %arg1 : i32, i32, i32
  }
  func.func @transform_1(%arg0: i32, %arg1: i32) -> (i32, i32, i32) {
    %c0_i32 = arith.constant 0 : i32
    %c0_i32_0 = arith.constant 0 : i32
    return %arg0, %c0_i32, %arg1 : i32, i32, i32
  }
  func.func @transform_2(%arg0: i32, %arg1: i32) -> (i32, i32) {
    %c0_i32 = arith.constant 0 : i32
    %c0_i32_0 = arith.constant 0 : i32
    %c0_i32_1 = arith.constant 0 : i32
    return %c0_i32, %c0_i32_0 : i32, i32
  }
  func.func @transform_3(%arg0: i32, %arg1: i32) -> (i32, i32, i32) {
    %c0_i32 = arith.constant 0 : i32
    %c0_i32_0 = arith.constant 0 : i32
    return %arg0, %c0_i32, %arg1 : i32, i32, i32
  }
}

</mosaic_0001>

<llo_original>
// kernel: netg_mlp_ns_forward.1
$region0: #{netg_mlp_ns_forward.1}
  #allocation0 [shape = 'u32[]', space=smem, size = 0x4, offset = 0x4, fixed_abs, tag = 'smem constant byte address 0x4 - core index']
  #allocation1 [shape = 'u32[72,128]{1,0:T(1,128)}', space=vmem, size = 0x9000, scoped, tag = 'internal scratch']
  %s0 = inlined_call_operand.vmem [shape: f32[2,4,256], index: 0, kind: input, shape index: {}]
  %s1 = inlined_call_operand.vmem [shape: f32[2,4,256], index: 1, kind: input, shape index: {}]
  %s2 = inlined_call_operand.vmem [shape: bf16[176,41], index: 2, kind: input, shape index: {}]
  %s3 = inlined_call_operand.vmem [shape: f32[2,3,256], index: 3, kind: output, shape index: {}]
  %s4 = sld [smem:[#allocation0]]
  $region45: #{netg_mlp_ns_forward.1} parent=0
    _
  %s6 = ssub.s32 1, %s4
  %s7 = scalar_select 0, %s6, %s4
  loop: start=0, step=1, limit=4
  $region2: #{netg_mlp_ns_forward.1} parent=0 // loop_pre_header
    _
  $region3: #{netg_mlp_ns_forward.1} parent=0 // loop_header
    %s9 = sphi 0, %s13
    %p10 = scmp.ge.s32.totalorder %s9, 4
    %s16 = sphi 0, %s28
    %s17 = sphi 0, %s24
    %s18 = sphi 0, %s16
    %s19 = sphi 0, %s17
    %s20 = sphi 0, %s18
    %s21 = sphi 0, %s19
    %s33 = sphi 0, %s35
    %s36 = sphi 0, %s33
    %s37 = sphi 0, %s36
    %s53 = sphi 0, %s37
    %s61 = sphi 0, %s63
    %s64 = sphi 0, %s61
    %s65 = sphi 0, %s64
    %s81 = sphi 0, %s65
    %s85 = sphi 0, %s85
    %s87 = sphi 0, %s85
    %s88 = sphi 0, %s87
    %s102 = sphi 0, %s88
    %s110 = sphi 0, %s112
    %s113 = sphi 0, %s110
    %s114 = sphi 0, %s113
    %s130 = sphi 0, %s114
  $region4: #{netg_mlp_ns_forward.1} parent=0 // loop_header_branch
    %12 = sbr.rel (%p10) target = $region8
  $region5: #{netg_mlp_ns_forward.1} parent=0 // loop_body
    %s14 = ssub.s32 %s9, 1
    %s15 = ssub.s32 %s9, 2
    %s22 = sadd.s32 1, %s17
    %p23 = scmp.ge.s32.totalorder %s22, 1
    %s24 = scalar_select %p23, 0, %s22
    %s25 = sadd.s32 1, %s16
    %s26 = scalar_select %p23, %s25, %s16
    %p27 = scmp.ge.s32.totalorder %s26, 2
    %s28 = scalar_select %p27, 0, %s26
    %s29 = ssub.s32 %s16, %s28
    %s30 = ssub.s32 %s17, %s24
    %s31 = sor.u32 %s29, %s30
    %p32 = scmp.eq.s32.totalorder %s31, 0
    %s34 = sadd.s32 %s33, 1
    %s35 = scalar_select %p32, %s33, %s34
    %p38 = pneg %p32
    %p39 = scmp.eq.s32.totalorder %s9, 1
    %p40 = por %p38, %p39
    %p41 = scmp.ne.s32.totalorder %s33, %s36
    %p42 = scmp.eq.s32.totalorder %s9, 0
    %p43 = por %p41, %p42
    %p44 = scmp.ne.s32.totalorder %s33, %s36
    %p45 = scmp.eq.s32.totalorder %s14, 1
    %p46 = por %p44, %p45
    %p47 = scmp.ne.s32.totalorder %s36, %s37
    %p48 = scmp.eq.s32.totalorder %s14, 0
    %p49 = por %p47, %p48
    %p50 = scmp.ne.s32.totalorder %s36, %s37
    %p51 = scmp.eq.s32.totalorder %s15, 1
    %p52 = por %p50, %p51
    %p54 = scmp.ne.s32.totalorder %s37, %s53
    %p55 = scmp.eq.s32.totalorder %s15, 0
    %p56 = por %p54, %p55
    %s57 = ssub.s32 %s16, %s28
    %s58 = ssub.s32 %s17, %s24
    %s59 = sor.u32 %s57, %s58
    %p60 = scmp.eq.s32.totalorder %s59, 0
    %s62 = sadd.s32 %s61, 1
    %s63 = scalar_select %p60, %s61, %s62
    %p66 = pneg %p60
    %p67 = scmp.eq.s32.totalorder %s9, 1
    %p68 = por %p66, %p67
    %p69 = scmp.ne.s32.totalorder %s61, %s64
    %p70 = scmp.eq.s32.totalorder %s9, 0
    %p71 = por %p69, %p70
    %p72 = scmp.ne.s32.totalorder %s61, %s64
    %p73 = scmp.eq.s32.totalorder %s14, 1
    %p74 = por %p72, %p73
    %p75 = scmp.ne.s32.totalorder %s64, %s65
    %p76 = scmp.eq.s32.totalorder %s14, 0
    %p77 = por %p75, %p76
    %p78 = scmp.ne.s32.totalorder %s64, %s65
    %p79 = scmp.eq.s32.totalorder %s15, 1
    %p80 = por %p78, %p79
    %p82 = scmp.ne.s32.totalorder %s65, %s81
    %p83 = scmp.eq.s32.totalorder %s15, 0
    %p84 = por %p82, %p83
    %s86 = sadd.s32 %s85, 1
    %p89 = scmp.eq.s32.totalorder %s9, 1
    %p90 = scmp.ne.s32.totalorder %s85, %s87
    %p91 = scmp.eq.s32.totalorder %s9, 0
    %p92 = por %p90, %p91
    %p93 = scmp.ne.s32.totalorder %s85, %s87
    %p94 = scmp.eq.s32.totalorder %s14, 1
    %p95 = por %p93, %p94
    %p96 = scmp.ne.s32.totalorder %s87, %s88
    %p97 = scmp.eq.s32.totalorder %s14, 0
    %p98 = por %p96, %p97
    %p99 = scmp.ne.s32.totalorder %s87, %s88
    %p100 = scmp.eq.s32.totalorder %s15, 1
    %p101 = por %p99, %p100
    %p103 = scmp.ne.s32.totalorder %s88, %s102
    %p104 = scmp.eq.s32.totalorder %s15, 0
    %p105 = por %p103, %p104
    %s106 = ssub.s32 %s16, %s28
    %s107 = ssub.s32 %s17, %s24
    %s108 = sor.u32 %s106, %s107
    %p109 = scmp.eq.s32.totalorder %s108, 0
    %s111 = sadd.s32 %s110, 1
    %s112 = scalar_select %p109, %s110, %s111
    %p115 = pneg %p109
    %p116 = scmp.eq.s32.totalorder %s9, 1
    %p117 = por %p115, %p116
    %p118 = scmp.ne.s32.totalorder %s110, %s113
    %p119 = scmp.eq.s32.totalorder %s9, 0
    %p120 = por %p118, %p119
    %p121 = scmp.ne.s32.totalorder %s110, %s113
    %p122 = scmp.eq.s32.totalorder %s14, 1
    %p123 = por %p121, %p122
    %p124 = scmp.ne.s32.totalorder %s113, %s114
    %p125 = scmp.eq.s32.totalorder %s14, 0
    %p126 = por %p124, %p125
    %p127 = scmp.ne.s32.totalorder %s113, %s114
    %p128 = scmp.eq.s32.totalorder %s15, 1
    %p129 = por %p127, %p128
    %p131 = scmp.ne.s32.totalorder %s114, %s130
    %p132 = scmp.eq.s32.totalorder %s15, 0
    %p133 = por %p131, %p132
    %p134 = scmp.le.s32.totalorder 1, %s9
    %p135 = scmp.lt.s32.totalorder %s9, 3
    %p136 = pnand %p134, %p135
    %p137 = pneg %p136
    // Predicated region
    $region9: #{netg_mlp_ns_forward.1} parent=5 // pred_check
      _
    $region10: #{netg_mlp_ns_forward.1} parent=5 // pred_check_branch
      %139 = sbr.rel (%p136) target = $region12
    $region11: #{netg_mlp_ns_forward.1} parent=5 // pred_region
      %s140 = ssub.s32 %s9, 1
      // Predicated region
      $region13: #{netg_mlp_ns_forward.1} parent=11 // pred_check
        %p141 = pneg %p98
      $region14: #{netg_mlp_ns_forward.1} parent=11 // pred_check_branch
        %143 = sbr.rel (%p141) target = $region16
      $region15: #{netg_mlp_ns_forward.1} parent=11 // pred_region
        _
      $region16: #{netg_mlp_ns_forward.1} parent=11 // pred_fallthru
        _
    $region12: #{netg_mlp_ns_forward.1} parent=5 // pred_fallthru
      _
    %p144 = scmp.lt.s32.totalorder %s9, 2
    // Predicated region
    $region17: #{netg_mlp_ns_forward.1} parent=5 // pred_check
      %p145 = pneg %p144
    $region18: #{netg_mlp_ns_forward.1} parent=5 // pred_check_branch
      %147 = sbr.rel (%p145) target = $region20
    $region19: #{netg_mlp_ns_forward.1} parent=5 // pred_region
      // Predicated region
      $region21: #{netg_mlp_ns_forward.1} parent=19 // pred_check
        %p148 = pneg %p43
      $region22: #{netg_mlp_ns_forward.1} parent=19 // pred_check_branch
        %150 = sbr.rel (%p148) target = $region24
      $region23: #{netg_mlp_ns_forward.1} parent=19 // pred_region
        %s151 = smul.u32 2, %s17
        %p152 = scmp.lt.s32.totalorder %s16, 1
        %s153 = scalar_select %p152, %s16, 1
        %p154 = scmp.lt.s32.totalorder %s151, 1
        %s155 = scalar_select %p154, %s151, 1
        %s156 = smul.addr %s153, 2
        %s157 = sadd.s32 %s155, %s156
        %s158 = smul.addr %s157, 4
        %s159 = scalar_lea.vmem %s0, %s158
        %s160 = smul.u32 2, %s17
      $region24: #{netg_mlp_ns_forward.1} parent=19 // pred_fallthru
        _
      // Predicated region
      $region25: #{netg_mlp_ns_forward.1} parent=19 // pred_check
        %p161 = pneg %p71
      $region26: #{netg_mlp_ns_forward.1} parent=19 // pred_check_branch
        %163 = sbr.rel (%p161) target = $region28
      $region27: #{netg_mlp_ns_forward.1} parent=19 // pred_region
        %s164 = smul.u32 2, %s17
        %p165 = scmp.lt.s32.totalorder %s16, 1
        %s166 = scalar_select %p165, %s16, 1
        %p167 = scmp.lt.s32.totalorder %s164, 1
        %s168 = scalar_select %p167, %s164, 1
        %s169 = smul.addr %s166, 2
        %s170 = sadd.s32 %s168, %s169
        %s171 = smul.addr %s170, 4
        %s172 = scalar_lea.vmem %s1, %s171
        %s173 = smul.u32 2, %s17
      $region28: #{netg_mlp_ns_forward.1} parent=19 // pred_fallthru
        _
    $region20: #{netg_mlp_ns_forward.1} parent=5 // pred_fallthru
      _
    %p174 = scmp.le.s32.totalorder 1, %s9
    %p175 = scmp.lt.s32.totalorder %s9, 3
    %p176 = pnand %p174, %p175
    %p177 = pneg %p176
    // Predicated region
    $region29: #{netg_mlp_ns_forward.1} parent=5 // pred_check
      _
    $region30: #{netg_mlp_ns_forward.1} parent=5 // pred_check_branch
      %179 = sbr.rel (%p176) target = $region32
    $region31: #{netg_mlp_ns_forward.1} parent=5 // pred_region
      %s180 = ssub.s32 %s9, 1
      %s181 = smul.u32 2, %s19
      %p182 = scmp.lt.s32.totalorder %s18, 1
      %s183 = scalar_select %p182, %s18, 1
      %p184 = scmp.lt.s32.totalorder %s181, 1
      %s185 = scalar_select %p184, %s181, 1
      %s186 = smul.addr %s183, 2
      %s187 = sadd.s32 %s185, %s186
      %s188 = smul.addr %s187, 4
      %s189 = scalar_lea.vmem %s0, %s188
      %p190 = pneg %p49
      %p191 = pneg %p46
      %s192 = smul.u32 2, %s19
      %p193 = scmp.lt.s32.totalorder %s18, 1
      %s194 = scalar_select %p193, %s18, 1
      %p195 = scmp.lt.s32.totalorder %s192, 1
      %s196 = scalar_select %p195, %s192, 1
      %s197 = smul.addr %s194, 2
      %s198 = sadd.s32 %s196, %s197
      %s199 = smul.addr %s198, 4
      %s200 = scalar_lea.vmem %s1, %s199
      %p201 = pneg %p77
      %p202 = pneg %p74
      %p203 = pneg %p98
      %p204 = pneg %p95
      %p205 = pneg %p126
      %p206 = pneg %p123
      %s207 = smul.u32 2, %s19
      %p208 = scmp.lt.s32.totalorder %s18, 1
      %s209 = scalar_select %p208, %s18, 1
      %p210 = scmp.lt.s32.totalorder %s207, 1
      %s211 = scalar_select %p210, %s207, 1
      %s212 = smul.addr %s209, 2
      %s213 = sadd.s32 %s211, %s212
      %s214 = smul.addr %s213, 4
      %s215 = scalar_lea.vmem %s3, %s214
      %s216 = smul.u32 2, %s19
      %p217 = scmp.lt.s32.totalorder %s18, 1
      %s218 = scalar_select %p217, %s18, 1
      %p219 = scmp.lt.s32.totalorder %s216, 1
      %s220 = scalar_select %p219, %s216, 1
      %s221 = smul.addr %s218, 2
      %s222 = sadd.s32 %s220, %s221
      %s223 = smul.addr %s222, 4
      %s224 = scalar_lea.vmem %s0, %s223
      %s225 = smul.u32 2, %s19
      %s226 = smul.u32 2, %s19
      %p227 = scmp.lt.s32.totalorder %s18, 1
      %s228 = scalar_select %p227, %s18, 1
      %p229 = scmp.lt.s32.totalorder %s226, 1
      %s230 = scalar_select %p229, %s226, 1
      %s231 = smul.addr %s228, 2
      %s232 = sadd.s32 %s230, %s231
      %s233 = smul.addr %s232, 4
      %s234 = scalar_lea.vmem %s1, %s233
      %s235 = smul.u32 2, %s19
      %s236 = smul.u32 2, %s19
      %p237 = scmp.lt.s32.totalorder %s18, 1
      %s238 = scalar_select %p237, %s18, 1
      %p239 = scmp.lt.s32.totalorder %s236, 1
      %s240 = scalar_select %p239, %s236, 1
      %s241 = smul.addr %s238, 2
      %s242 = sadd.s32 %s240, %s241
      %s243 = smul.addr %s242, 4
      %s244 = scalar_lea.vmem %s3, %s243
      %s245 = smul.u32 2, %s19
      %v247 = vld [vmem:[%s224] sm:$0xff]
      %249 = vst [vmem:[#allocation1] ss:$2 sm:$0xff] %v247
      %v250 = vld.sshfl [vmem:[#allocation1] sm:$0xff pattern:$0x75316420]
      %v251 = vld.sshfl [vmem:[#allocation1 + $0x8] sm:$0xff pattern:$0x75316420]
      %v254 = vpack.c.bf16 %v250, %v250
      %v255 = vpack.c.bf16 %v251, %v251
      %v256 = vld [vmem:[%s234] sm:$0xff]
      %258 = vst [vmem:[#allocation1] ss:$2 sm:$0xff] %v256
      %v259 = vld.sshfl [vmem:[#allocation1] sm:$0xff pattern:$0x75316420]
      %v260 = vld.sshfl [vmem:[#allocation1 + $0x8] sm:$0xff pattern:$0x75316420]
      %v263 = vpack.c.bf16 %v259, %v259
      %v264 = vpack.c.bf16 %v260, %v260
      %v265 = vld [vmem:[%s2] sm:$0xf]
      %v266 = vld [vmem:[%s2 + $0x4] sm:$0xf]
      %v267 = vld [vmem:[%s2 + $0x8] sm:$0xf]
      %v268 = vld [vmem:[%s2 + $0xc] sm:$0xf]
      %v269 = vunpack.c.l.bf16 %v265
      %v270 = vunpack.c.l.bf16 %v266
      %v271 = vunpack.c.l.bf16 %v267
      %v272 = vunpack.c.l.bf16 %v268
      %274 = vset.pattern.permute.xlu0 4
      %275 = vperm.xlu0 %274, %v269
      %v276 = vpop.permute.xlu0 %275
      %279 = vset.pattern.permute.xlu0 4
      %280 = vperm.xlu0 %279, %v270
      %v281 = vpop.permute.xlu0 %280
      %284 = vset.pattern.permute.xlu0 4
      %285 = vperm.xlu0 %284, %v271
      %v286 = vpop.permute.xlu0 %285
      %289 = vset.pattern.permute.xlu0 4
      %290 = vperm.xlu0 %289, %v272
      %v291 = vpop.permute.xlu0 %290
      %v297 = vunpack.c.l.b16 %v265
      %v298 = vunpack.c.l.b16 %v266
      %v299 = vunpack.c.l.b16 %v267
      %v300 = vunpack.c.l.b16 %v268
      %v301 = vpack.c.b16 %v298, %v297
      %v302 = vpack.c.b16 %v300, %v299
      %vm303 = vcmask 31744
      %v305 = vsel %vm303, %v301, 0
      %v308 = vsel %vm303, %v302, 0
      %vm310 = vcmask 1041408
      %v312 = vsel %vm310, %v263, 0
      %v315 = vsel %vm310, %v264, 0
      %317 = vmatpush.bf16.msra.mxu0 0
      %318 = vmatpush.bf16.msra.mxu0 0
      %319 = vmatpush.bf16.msra.mxu0 0
      %320 = vmatpush.bf16.msra.mxu0 0
      %321 = vmatpush.bf16.msra.mxu0 0
      %322 = vmatpush.bf16.msra.mxu0 0
      %323 = vmatpush.bf16.msra.mxu0 0
      %324 = vmatpush.bf16.msra.mxu0 %v312
      %325 = vmatmul.bf16.gmra.mxu0 %v305
      %v326 = vpop.f32.mrf.mxu0
      %v327 = vadd.f32 %v276, %v326
      %v328 = vpop.f32.mrf.mxu0
      %v329 = vadd.f32 %v281, %v328
      %330 = vmatmul.bf16.gmra.mxu0 %v308
      %v331 = vpop.f32.mrf.mxu0
      %v332 = vadd.f32 %v286, %v331
      %v333 = vpop.f32.mrf.mxu0
      %v334 = vadd.f32 %v291, %v333
      %335 = vdwg.mxu0
      %336 = vmatpush.bf16.msra.mxu0 0
      %337 = vmatpush.bf16.msra.mxu0 0
      %338 = vmatpush.bf16.msra.mxu0 0
      %339 = vmatpush.bf16.msra.mxu0 0
      %340 = vmatpush.bf16.msra.mxu0 0
      %341 = vmatpush.bf16.msra.mxu0 0
      %342 = vmatpush.bf16.msra.mxu0 0
      %343 = vmatpush.bf16.msra.mxu0 %v315
      %344 = vmatmul.bf16.gmra.mxu0 %v305
      %v345 = vpop.f32.mrf.mxu0
      %v346 = vadd.f32 %v276, %v345
      %v347 = vpop.f32.mrf.mxu0
      %v348 = vadd.f32 %v281, %v347
      %349 = vmatmul.bf16.gmra.mxu0 %v308
      %v350 = vpop.f32.mrf.mxu0
      %v351 = vadd.f32 %v286, %v350
      %v352 = vpop.f32.mrf.mxu0
      %v353 = vadd.f32 %v291, %v352
      %354 = vdwg.mxu0
      %v355 = vmax.f32 %v327, 0.0
      %v356 = vmax.f32 %v346, 0.0
      %v357 = vmax.f32 %v329, 0.0
      %v358 = vmax.f32 %v348, 0.0
      %v359 = vmax.f32 %v332, 0.0
      %v360 = vmax.f32 %v351, 0.0
      %v361 = vmax.f32 %v334, 0.0
      %v362 = vmax.f32 %v353, 0.0
      %v363 = vpack.c.bf16 %v357, %v355
      %v364 = vpack.c.bf16 %v358, %v356
      %v365 = vpack.c.bf16 %v361, %v359
      %v366 = vpack.c.bf16 %v362, %v360
      %v367 = vld [vmem:[%s2 + $0x10] sm:$0xf]
      %v368 = vld [vmem:[%s2 + $0x14] sm:$0xf]
      %v369 = vld [vmem:[%s2 + $0x18] sm:$0xf]
      %v370 = vld [vmem:[%s2 + $0x1c] sm:$0xf]
      %v371 = vunpack.c.l.bf16 %v367
      %v372 = vunpack.c.l.bf16 %v368
      %v373 = vunpack.c.l.bf16 %v369
      %v374 = vunpack.c.l.bf16 %v370
      %376 = vset.pattern.permute.xlu0 32
      %377 = vperm.xlu0 %376, %v371
      %v378 = vpop.permute.xlu0 %377
      %381 = vset.pattern.permute.xlu0 32
      %382 = vperm.xlu0 %381, %v372
      %v383 = vpop.permute.xlu0 %382
      %386 = vset.pattern.permute.xlu0 32
      %387 = vperm.xlu0 %386, %v373
      %v388 = vpop.permute.xlu0 %387
      %391 = vset.pattern.permute.xlu0 32
      %392 = vperm.xlu0 %391, %v374
      %v393 = vpop.permute.xlu0 %392
      %v399 = vunpack.c.l.b16 %v367
      %v400 = vunpack.c.l.b16 %v368
      %v401 = vunpack.c.l.b16 %v369
      %v402 = vunpack.c.l.b16 %v370
      %v403 = vpack.c.b16 %v400, %v399
      %v404 = vpack.c.b16 %v402, %v401
      %vm405 = vcmask 261120
      %v407 = vsel %vm405, %v403, 0
      %v410 = vsel %vm405, %v404, 0
      %412 = vmatpush.bf16.msra.mxu0 0
      %413 = vmatpush.bf16.msra.mxu0 0
      %414 = vmatpush.bf16.msra.mxu0 0
      %415 = vmatpush.bf16.msra.mxu0 0
      %416 = vmatpush.bf16.msra.mxu0 0
      %417 = vmatpush.bf16.msra.mxu0 0
      %418 = vmatpush.bf16.msra.mxu0 %v365
      %419 = vmatpush.bf16.msra.mxu0 %v363
      %420 = vmatmul.bf16.gmra.mxu0 %v407
      %v421 = vpop.f32.mrf.mxu0
      %v422 = vadd.f32 %v378, %v421
      %v423 = vpop.f32.mrf.mxu0
      %v424 = vadd.f32 %v383, %v423
      %425 = vmatmul.bf16.gmra.mxu0 %v410
      %v426 = vpop.f32.mrf.mxu0
      %v427 = vadd.f32 %v388, %v426
      %v428 = vpop.f32.mrf.mxu0
      %v429 = vadd.f32 %v393, %v428
      %430 = vdwg.mxu0
      %431 = vmatpush.bf16.msra.mxu0 0
      %432 = vmatpush.bf16.msra.mxu0 0
      %433 = vmatpush.bf16.msra.mxu0 0
      %434 = vmatpush.bf16.msra.mxu0 0
      %435 = vmatpush.bf16.msra.mxu0 0
      %436 = vmatpush.bf16.msra.mxu0 0
      %437 = vmatpush.bf16.msra.mxu0 %v366
      %438 = vmatpush.bf16.msra.mxu0 %v364
      %439 = vmatmul.bf16.gmra.mxu0 %v407
      %v440 = vpop.f32.mrf.mxu0
      %v441 = vadd.f32 %v378, %v440
      %v442 = vpop.f32.mrf.mxu0
      %v443 = vadd.f32 %v383, %v442
      %444 = vmatmul.bf16.gmra.mxu0 %v410
      %v445 = vpop.f32.mrf.mxu0
      %v446 = vadd.f32 %v388, %v445
      %v447 = vpop.f32.mrf.mxu0
      %v448 = vadd.f32 %v393, %v447
      %449 = vdwg.mxu0
      %v450 = vmax.f32 %v422, 0.0
      %v451 = vmax.f32 %v441, 0.0
      %v452 = vmax.f32 %v424, 0.0
      %v453 = vmax.f32 %v443, 0.0
      %v454 = vmax.f32 %v427, 0.0
      %v455 = vmax.f32 %v446, 0.0
      %v456 = vmax.f32 %v429, 0.0
      %v457 = vmax.f32 %v448, 0.0
      %v458 = vpack.c.bf16 %v452, %v450
      %v459 = vpack.c.bf16 %v453, %v451
      %v460 = vpack.c.bf16 %v456, %v454
      %v461 = vpack.c.bf16 %v457, %v455
      %v462 = vld [vmem:[%s2 + $0x20] sm:$0xf]
      %v463 = vld [vmem:[%s2 + $0x24] sm:$0xf]
      %v464 = vld [vmem:[%s2 + $0x28] sm:$0xf]
      %v465 = vld [vmem:[%s2 + $0x2c] sm:$0xf]
      %v466 = vunpack.c.l.bf16 %v462
      %v467 = vunpack.c.l.bf16 %v463
      %v468 = vunpack.c.l.bf16 %v464
      %v469 = vunpack.c.l.bf16 %v465
      %471 = vset.pattern.permute.xlu0 32
      %472 = vperm.xlu0 %471, %v466
      %v473 = vpop.permute.xlu0 %472
      %476 = vset.pattern.permute.xlu0 32
      %477 = vperm.xlu0 %476, %v467
      %v478 = vpop.permute.xlu0 %477
      %481 = vset.pattern.permute.xlu0 32
      %482 = vperm.xlu0 %481, %v468
      %v483 = vpop.permute.xlu0 %482
      %486 = vset.pattern.permute.xlu0 32
      %487 = vperm.xlu0 %486, %v469
      %v488 = vpop.permute.xlu0 %487
      %v494 = vunpack.c.l.b16 %v462
      %v495 = vunpack.c.l.b16 %v463
      %v496 = vunpack.c.l.b16 %v464
      %v497 = vunpack.c.l.b16 %v465
      %v498 = vpack.c.b16 %v495, %v494
      %v499 = vpack.c.b16 %v497, %v496
      %v501 = vsel %vm405, %v498, 0
      %v504 = vsel %vm405, %v499, 0
      %506 = vmatpush.bf16.msra.mxu0 0
      %507 = vmatpush.bf16.msra.mxu0 0
      %508 = vmatpush.bf16.msra.mxu0 0
      %509 = vmatpush.bf16.msra.mxu0 0
      %510 = vmatpush.bf16.msra.mxu0 0
      %511 = vmatpush.bf16.msra.mxu0 0
      %512 = vmatpush.bf16.msra.mxu0 %v460
      %513 = vmatpush.bf16.msra.mxu0 %v458
      %514 = vmatmul.bf16.gmra.mxu0 %v501
      %v515 = vpop.f32.mrf.mxu0
      %v516 = vadd.f32 %v473, %v515
      %v517 = vpop.f32.mrf.mxu0
      %v518 = vadd.f32 %v478, %v517
      %519 = vmatmul.bf16.gmra.mxu0 %v504
      %v520 = vpop.f32.mrf.mxu0
      %v521 = vadd.f32 %v483, %v520
      %v522 = vpop.f32.mrf.mxu0
      %v523 = vadd.f32 %v488, %v522
      %524 = vdwg.mxu0
      %525 = vmatpush.bf16.msra.mxu0 0
      %526 = vmatpush.bf16.msra.mxu0 0
      %527 = vmatpush.bf16.msra.mxu0 0
      %528 = vmatpush.bf16.msra.mxu0 0
      %529 = vmatpush.bf16.msra.mxu0 0
      %530 = vmatpush.bf16.msra.mxu0 0
      %531 = vmatpush.bf16.msra.mxu0 %v461
      %532 = vmatpush.bf16.msra.mxu0 %v459
      %533 = vmatmul.bf16.gmra.mxu0 %v501
      %v534 = vpop.f32.mrf.mxu0
      %v535 = vadd.f32 %v473, %v534
      %v536 = vpop.f32.mrf.mxu0
      %v537 = vadd.f32 %v478, %v536
      %538 = vmatmul.bf16.gmra.mxu0 %v504
      %v539 = vpop.f32.mrf.mxu0
      %v540 = vadd.f32 %v483, %v539
      %v541 = vpop.f32.mrf.mxu0
      %v542 = vadd.f32 %v488, %v541
      %543 = vdwg.mxu0
      %v544 = vmax.f32 %v516, 0.0
      %v545 = vmax.f32 %v535, 0.0
      %v546 = vmax.f32 %v518, 0.0
      %v547 = vmax.f32 %v537, 0.0
      %v548 = vmax.f32 %v521, 0.0
      %v549 = vmax.f32 %v540, 0.0
      %v550 = vmax.f32 %v523, 0.0
      %v551 = vmax.f32 %v542, 0.0
      %v552 = vld [vmem:[%s2 + $0x30] sm:$0xf]
      %v553 = vld [vmem:[%s2 + $0x34] sm:$0xf]
      %v554 = vld [vmem:[%s2 + $0x38] sm:$0xf]
      %v555 = vld [vmem:[%s2 + $0x3c] sm:$0xf]
      %v556 = vpack.c.bf16 %v546, %v544
      %v557 = vpack.c.bf16 %v547, %v545
      %v558 = vpack.c.bf16 %v550, %v548
      %v559 = vpack.c.bf16 %v551, %v549
      %v564 = vunpack.c.l.b16 %v552
      %v565 = vunpack.c.l.b16 %v553
      %v566 = vunpack.c.l.b16 %v554
      %v567 = vunpack.c.l.b16 %v555
      %v568 = vpack.c.b16 %v565, %v564
      %v569 = vpack.c.b16 %v567, %v566
      %570 = vrot.lane.b32.xlu0 %v568, 124
      %v571 = vpop.permute.xlu0 %570
      %572 = vrot.lane.b32.xlu0 %v569, 124
      %v573 = vpop.permute.xlu0 %572
      %v575 = vsel %vm405, %v571, 0
      %v578 = vsel %vm405, %v573, 0
      %580 = vmatpush.bf16.msra.mxu0 0
      %581 = vmatpush.bf16.msra.mxu0 0
      %582 = vmatpush.bf16.msra.mxu0 0
      %583 = vmatpush.bf16.msra.mxu0 0
      %584 = vmatpush.bf16.msra.mxu0 0
      %585 = vmatpush.bf16.msra.mxu0 0
      %586 = vmatpush.bf16.msra.mxu0 %v558
      %587 = vmatpush.bf16.msra.mxu0 %v556
      %588 = vmatmul.bf16.gmra.mxu0 %v575
      %v589 = vpop.f32.mrf.mxu0
      %v590 = vadd.f32 0.0, %v589
      %v591 = vpop.f32.mrf.mxu0
      %v592 = vadd.f32 0.0, %v591
      %593 = vmatmul.bf16.gmra.mxu0 %v578
      %v594 = vpop.f32.mrf.mxu0
      %v595 = vadd.f32 0.0, %v594
      %v596 = vpop.f32.mrf.mxu0
      %v597 = vadd.f32 0.0, %v596
      %598 = vdwg.mxu0
      %599 = vmatpush.bf16.msra.mxu0 0
      %600 = vmatpush.bf16.msra.mxu0 0
      %601 = vmatpush.bf16.msra.mxu0 0
      %602 = vmatpush.bf16.msra.mxu0 0
      %603 = vmatpush.bf16.msra.mxu0 0
      %604 = vmatpush.bf16.msra.mxu0 0
      %605 = vmatpush.bf16.msra.mxu0 %v559
      %606 = vmatpush.bf16.msra.mxu0 %v557
      %607 = vmatmul.bf16.gmra.mxu0 %v575
      %v608 = vpop.f32.mrf.mxu0
      %v609 = vadd.f32 0.0, %v608
      %v610 = vpop.f32.mrf.mxu0
      %v611 = vadd.f32 0.0, %v610
      %612 = vmatmul.bf16.gmra.mxu0 %v578
      %v613 = vpop.f32.mrf.mxu0
      %v614 = vadd.f32 0.0, %v613
      %v615 = vpop.f32.mrf.mxu0
      %v616 = vadd.f32 0.0, %v615
      %617 = vdwg.mxu0
      %v619 = vsel %vm303, %v568, 0
      %v622 = vsel %vm303, %v569, 0
      %v625 = vsel %vm310, %v254, 0
      %v628 = vsel %vm310, %v255, 0
      %630 = vmatpush.bf16.msra.mxu0 0
      %631 = vmatpush.bf16.msra.mxu0 0
      %632 = vmatpush.bf16.msra.mxu0 0
      %633 = vmatpush.bf16.msra.mxu0 0
      %634 = vmatpush.bf16.msra.mxu0 0
      %635 = vmatpush.bf16.msra.mxu0 0
      %636 = vmatpush.bf16.msra.mxu0 0
      %637 = vmatpush.bf16.msra.mxu0 %v625
      %638 = vmatmul.bf16.gmra.mxu0 %v619
      %v639 = vpop.f32.mrf.mxu0
      %v640 = vadd.f32 %v590, %v639
      %v641 = vpop.f32.mrf.mxu0
      %v642 = vadd.f32 %v592, %v641
      %643 = vmatmul.bf16.gmra.mxu0 %v622
      %v644 = vpop.f32.mrf.mxu0
      %v645 = vadd.f32 %v595, %v644
      %v646 = vpop.f32.mrf.mxu0
      %v647 = vadd.f32 %v597, %v646
      %648 = vdwg.mxu0
      %649 = vmatpush.bf16.msra.mxu0 0
      %650 = vmatpush.bf16.msra.mxu0 0
      %651 = vmatpush.bf16.msra.mxu0 0
      %652 = vmatpush.bf16.msra.mxu0 0
      %653 = vmatpush.bf16.msra.mxu0 0
      %654 = vmatpush.bf16.msra.mxu0 0
      %655 = vmatpush.bf16.msra.mxu0 0
      %656 = vmatpush.bf16.msra.mxu0 %v628
      %657 = vmatmul.bf16.gmra.mxu0 %v619
      %v658 = vpop.f32.mrf.mxu0
      %v659 = vadd.f32 %v609, %v658
      %v660 = vpop.f32.mrf.mxu0
      %v661 = vadd.f32 %v611, %v660
      %662 = vmatmul.bf16.gmra.mxu0 %v622
      %v663 = vpop.f32.mrf.mxu0
      %v664 = vadd.f32 %v614, %v663
      %v665 = vpop.f32.mrf.mxu0
      %v666 = vadd.f32 %v616, %v665
      %667 = vdwg.mxu0
      %668 = vrot.lane.b32.xlu0 %v568, 92
      %v669 = vpop.permute.xlu0 %668
      %670 = vrot.lane.b32.xlu0 %v569, 92
      %v671 = vpop.permute.xlu0 %670
      %v673 = vsel %vm303, %v669, 0
      %v676 = vsel %vm303, %v671, 0
      %678 = vmatpush.bf16.msra.mxu0 0
      %679 = vmatpush.bf16.msra.mxu0 0
      %680 = vmatpush.bf16.msra.mxu0 0
      %681 = vmatpush.bf16.msra.mxu0 0
      %682 = vmatpush.bf16.msra.mxu0 0
      %683 = vmatpush.bf16.msra.mxu0 0
      %684 = vmatpush.bf16.msra.mxu0 0
      %685 = vmatpush.bf16.msra.mxu0 %v312
      %686 = vmatmul.bf16.gmra.mxu0 %v673
      %v687 = vpop.f32.mrf.mxu0
      %v688 = vadd.f32 0.0, %v687
      %v689 = vpop.f32.mrf.mxu0
      %v690 = vadd.f32 0.0, %v689
      %691 = vmatmul.bf16.gmra.mxu0 %v676
      %v692 = vpop.f32.mrf.mxu0
      %v693 = vadd.f32 0.0, %v692
      %v694 = vpop.f32.mrf.mxu0
      %v695 = vadd.f32 0.0, %v694
      %696 = vdwg.mxu0
      %697 = vmatpush.bf16.msra.mxu0 0
      %698 = vmatpush.bf16.msra.mxu0 0
      %699 = vmatpush.bf16.msra.mxu0 0
      %700 = vmatpush.bf16.msra.mxu0 0
      %701 = vmatpush.bf16.msra.mxu0 0
      %702 = vmatpush.bf16.msra.mxu0 0
      %703 = vmatpush.bf16.msra.mxu0 0
      %704 = vmatpush.bf16.msra.mxu0 %v315
      %705 = vmatmul.bf16.gmra.mxu0 %v673
      %v706 = vpop.f32.mrf.mxu0
      %v707 = vadd.f32 0.0, %v706
      %v708 = vpop.f32.mrf.mxu0
      %v709 = vadd.f32 0.0, %v708
      %710 = vmatmul.bf16.gmra.mxu0 %v676
      %v711 = vpop.f32.mrf.mxu0
      %v712 = vadd.f32 0.0, %v711
      %v713 = vpop.f32.mrf.mxu0
      %v714 = vadd.f32 0.0, %v713
      %715 = vdwg.mxu0
      %v716 = vadd.f32 %v640, %v688
      %v717 = vadd.f32 %v659, %v707
      %v718 = vadd.f32 %v642, %v690
      %v719 = vadd.f32 %v661, %v709
      %v720 = vadd.f32 %v645, %v693
      %v721 = vadd.f32 %v664, %v712
      %v722 = vadd.f32 %v647, %v695
      %v723 = vadd.f32 %v666, %v714
      %v724 = vunpack.c.l.bf16 %v552
      %v725 = vunpack.c.l.bf16 %v553
      %v726 = vunpack.c.l.bf16 %v554
      %v727 = vunpack.c.l.bf16 %v555
      %729 = vset.pattern.permute.xlu0 40
      %730 = vperm.xlu0 %729, %v724
      %v731 = vpop.permute.xlu0 %730
      %734 = vset.pattern.permute.xlu0 40
      %735 = vperm.xlu0 %734, %v725
      %v736 = vpop.permute.xlu0 %735
      %739 = vset.pattern.permute.xlu0 40
      %740 = vperm.xlu0 %739, %v726
      %v741 = vpop.permute.xlu0 %740
      %744 = vset.pattern.permute.xlu0 40
      %745 = vperm.xlu0 %744, %v727
      %v746 = vpop.permute.xlu0 %745
      %v748 = vadd.f32 %v716, %v731
      %v749 = vadd.f32 %v717, %v731
      %v750 = vadd.f32 %v718, %v736
      %v751 = vadd.f32 %v719, %v736
      %v752 = vadd.f32 %v720, %v741
      %v753 = vadd.f32 %v721, %v741
      %v754 = vadd.f32 %v722, %v746
      %v755 = vadd.f32 %v723, %v746
      %v756 = vmax.f32 %v748, 0.0
      %v757 = vmax.f32 %v749, 0.0
      %v758 = vmax.f32 %v750, 0.0
      %v759 = vmax.f32 %v751, 0.0
      %v760 = vmax.f32 %v752, 0.0
      %v761 = vmax.f32 %v753, 0.0
      %v762 = vmax.f32 %v754, 0.0
      %v763 = vmax.f32 %v755, 0.0
      %v764 = vpack.c.bf16 %v758, %v756
      %v765 = vpack.c.bf16 %v759, %v757
      %v766 = vpack.c.bf16 %v762, %v760
      %v767 = vpack.c.bf16 %v763, %v761
      %v768 = vld [vmem:[%s2 + $0x40] sm:$0xf]
      %v769 = vld [vmem:[%s2 + $0x44] sm:$0xf]
      %v770 = vld [vmem:[%s2 + $0x48] sm:$0xf]
      %v771 = vld [vmem:[%s2 + $0x4c] sm:$0xf]
      %v772 = vunpack.c.l.bf16 %v768
      %v773 = vunpack.c.l.bf16 %v769
      %v774 = vunpack.c.l.bf16 %v770
      %v775 = vunpack.c.l.bf16 %v771
      %777 = vset.pattern.permute.xlu0 32
      %778 = vperm.xlu0 %777, %v772
      %v779 = vpop.permute.xlu0 %778
      %782 = vset.pattern.permute.xlu0 32
      %783 = vperm.xlu0 %782, %v773
      %v784 = vpop.permute.xlu0 %783
      %787 = vset.pattern.permute.xlu0 32
      %788 = vperm.xlu0 %787, %v774
      %v789 = vpop.permute.xlu0 %788
      %792 = vset.pattern.permute.xlu0 32
      %793 = vperm.xlu0 %792, %v775
      %v794 = vpop.permute.xlu0 %793
      %v800 = vunpack.c.l.b16 %v768
      %v801 = vunpack.c.l.b16 %v769
      %v802 = vunpack.c.l.b16 %v770
      %v803 = vunpack.c.l.b16 %v771
      %v804 = vpack.c.b16 %v801, %v800
      %v805 = vpack.c.b16 %v803, %v802
      %v807 = vsel %vm405, %v804, 0
      %v810 = vsel %vm405, %v805, 0
      %812 = vmatpush.bf16.msra.mxu0 0
      %813 = vmatpush.bf16.msra.mxu0 0
      %814 = vmatpush.bf16.msra.mxu0 0
      %815 = vmatpush.bf16.msra.mxu0 0
      %816 = vmatpush.bf16.msra.mxu0 0
      %817 = vmatpush.bf16.msra.mxu0 0
      %818 = vmatpush.bf16.msra.mxu0 %v766
      %819 = vmatpush.bf16.msra.mxu0 %v764
      %820 = vmatmul.bf16.gmra.mxu0 %v807
      %v821 = vpop.f32.mrf.mxu0
      %v822 = vadd.f32 %v779, %v821
      %v823 = vpop.f32.mrf.mxu0
      %v824 = vadd.f32 %v784, %v823
      %825 = vmatmul.bf16.gmra.mxu0 %v810
      %v826 = vpop.f32.mrf.mxu0
      %v827 = vadd.f32 %v789, %v826
      %v828 = vpop.f32.mrf.mxu0
      %v829 = vadd.f32 %v794, %v828
      %830 = vdwg.mxu0
      %831 = vmatpush.bf16.msra.mxu0 0
      %832 = vmatpush.bf16.msra.mxu0 0
      %833 = vmatpush.bf16.msra.mxu0 0
      %834 = vmatpush.bf16.msra.mxu0 0
      %835 = vmatpush.bf16.msra.mxu0 0
      %836 = vmatpush.bf16.msra.mxu0 0
      %837 = vmatpush.bf16.msra.mxu0 %v767
      %838 = vmatpush.bf16.msra.mxu0 %v765
      %839 = vmatmul.bf16.gmra.mxu0 %v807
      %v840 = vpop.f32.mrf.mxu0
      %v841 = vadd.f32 %v779, %v840
      %v842 = vpop.f32.mrf.mxu0
      %v843 = vadd.f32 %v784, %v842
      %844 = vmatmul.bf16.gmra.mxu0 %v810
      %v845 = vpop.f32.mrf.mxu0
      %v846 = vadd.f32 %v789, %v845
      %v847 = vpop.f32.mrf.mxu0
      %v848 = vadd.f32 %v794, %v847
      %849 = vdwg.mxu0
      %v850 = vmax.f32 %v822, 0.0
      %v851 = vmax.f32 %v841, 0.0
      %v852 = vmax.f32 %v824, 0.0
      %v853 = vmax.f32 %v843, 0.0
      %v854 = vmax.f32 %v827, 0.0
      %v855 = vmax.f32 %v846, 0.0
      %v856 = vmax.f32 %v829, 0.0
      %v857 = vmax.f32 %v848, 0.0
      %v858 = vpack.c.bf16 %v852, %v850
      %v859 = vpack.c.bf16 %v853, %v851
      %v860 = vpack.c.bf16 %v856, %v854
      %v861 = vpack.c.bf16 %v857, %v855
      %v862 = vld [vmem:[%s2 + $0x50] sm:$0x3]
      %v863 = vunpack.c.l.bf16 %v862
      %865 = vset.pattern.permute.xlu0 32
      %866 = vperm.xlu0 %865, %v863
      %v867 = vpop.permute.xlu0 %866
      %v870 = vsel %vm405, %v862, 0
      %872 = vmatpush.bf16.msra.mxu0 0
      %873 = vmatpush.bf16.msra.mxu0 0
      %874 = vmatpush.bf16.msra.mxu0 0
      %875 = vmatpush.bf16.msra.mxu0 0
      %876 = vmatpush.bf16.msra.mxu0 0
      %877 = vmatpush.bf16.msra.mxu0 0
      %878 = vmatpush.bf16.msra.mxu0 %v860
      %879 = vmatpush.bf16.msra.mxu0 %v858
      %880 = vmatmul.bf16.gmra.mxu0 %v870
      %v881 = vpop.f32.mrf.mxu0
      %v882 = vadd.f32 %v867, %v881
      %v883 = vpop.f32.mrf.mxu0
      %884 = vdwg.mxu0
      %885 = vmatpush.bf16.msra.mxu0 0
      %886 = vmatpush.bf16.msra.mxu0 0
      %887 = vmatpush.bf16.msra.mxu0 0
      %888 = vmatpush.bf16.msra.mxu0 0
      %889 = vmatpush.bf16.msra.mxu0 0
      %890 = vmatpush.bf16.msra.mxu0 0
      %891 = vmatpush.bf16.msra.mxu0 %v861
      %892 = vmatpush.bf16.msra.mxu0 %v859
      %893 = vmatmul.bf16.gmra.mxu0 %v870
      %v894 = vpop.f32.mrf.mxu0
      %v895 = vadd.f32 %v867, %v894
      %v896 = vpop.f32.mrf.mxu0
      %897 = vdwg.mxu0
      %v898 = vtanh.pop %v882
      %v899 = vtanh.pop %v895
      %v902 = vrot.slane %v899, 4
      %vm903 = vcmask 1043456
      %v904 = vsel %vm903, %v898, %v902
      %906 = vst [vmem:[%s244] sm:$0x77] %v904
      %s907 = smul.u32 2, %s19
      %p908 = scmp.lt.s32.totalorder %s18, 1
      %s909 = scalar_select %p908, %s18, 1
      %p910 = scmp.lt.s32.totalorder %s907, 1
      %s911 = scalar_select %p910, %s907, 1
      %s912 = smul.addr %s909, 2
      %s913 = sadd.s32 %s911, %s912
      %s914 = smul.addr %s913, 4
      %s915 = scalar_lea.vmem %s3, %s914
      // Predicated region
      $region33: #{netg_mlp_ns_forward.1} parent=31 // pred_check
        %p916 = pneg %p123
      $region34: #{netg_mlp_ns_forward.1} parent=31 // pred_check_branch
        %918 = sbr.rel (%p916) target = $region36
      $region35: #{netg_mlp_ns_forward.1} parent=31 // pred_region
        %s919 = smul.u32 2, %s19
      $region36: #{netg_mlp_ns_forward.1} parent=31 // pred_fallthru
        _
    $region32: #{netg_mlp_ns_forward.1} parent=5 // pred_fallthru
      _
    %p920 = scmp.le.s32.totalorder 2, %s9
    // Predicated region
    $region37: #{netg_mlp_ns_forward.1} parent=5 // pred_check
      %p921 = pneg %p920
    $region38: #{netg_mlp_ns_forward.1} parent=5 // pred_check_branch
      %923 = sbr.rel (%p921) target = $region40
    $region39: #{netg_mlp_ns_forward.1} parent=5 // pred_region
      %s924 = ssub.s32 %s9, 2
      // Predicated region
      $region41: #{netg_mlp_ns_forward.1} parent=39 // pred_check
        %p925 = pneg %p129
      $region42: #{netg_mlp_ns_forward.1} parent=39 // pred_check_branch
        %927 = sbr.rel (%p925) target = $region44
      $region43: #{netg_mlp_ns_forward.1} parent=39 // pred_region
        %s928 = smul.u32 2, %s21
        %p929 = scmp.lt.s32.totalorder %s20, 1
        %s930 = scalar_select %p929, %s20, 1
        %p931 = scmp.lt.s32.totalorder %s928, 1
        %s932 = scalar_select %p931, %s928, 1
        %s933 = smul.addr %s930, 2
        %s934 = sadd.s32 %s932, %s933
        %s935 = smul.addr %s934, 4
        %s936 = scalar_lea.vmem %s3, %s935
      $region44: #{netg_mlp_ns_forward.1} parent=39 // pred_fallthru
        _
    $region40: #{netg_mlp_ns_forward.1} parent=5 // pred_fallthru
      _
  $region6: #{netg_mlp_ns_forward.1} parent=0 // loop_footer
    %s13 = sadd.s32 1, %s9
  $region7: #{netg_mlp_ns_forward.1} parent=0 // loop_footer_branch
    %8 = sbr.rel target = $region3
  $region8: #{netg_mlp_ns_forward.1} parent=0 // loop_exit
    _

</llo_original>
